<compile_context>
chip_gen: v7x
topology: tpu7x:2x2x1
jax: 0.10.0
libtpu: 0.0.40
codegen_flags: <defaults>
</compile_context>

<pallas_src>
import functools

import jax
import jax.numpy as jnp
from jax import lax
from jax.experimental import pallas as pl
from jax.experimental.pallas import tpu as pltpu


def _patch_merging_kernel(t_ref, w_ref, gb_ref, o_ref, *, eps):
    """One block of output tokens.

    t_ref:  (tm, 4C) bf16   raw merged-token features [x0 | x1 | x2 | x3].
    w_ref:  (4C, 2C) bf16   gamma-folded projection  Wg = diag(gamma) @ W^T.
    gb_ref: (2, 2C)  f32    row 0 = colsum(Wg) (bf16-rounded, matches MXU operand),
                            row 1 = beta @ W^T.
    o_ref:  (tm, 2C)        output tokens.

    LayerNorm is applied around the matmul:
        out = rstd * (t @ Wg) - (rstd * mean) * colsum(Wg) + beta @ W^T
    so the raw bf16 block feeds the MXU directly; all statistics stay in f32.

    NOTE: for a partial boundary block (M % tm != 0) the out-of-range rows hold
    garbage (possibly NaN/inf after LN); every op here is row-wise and those rows
    are never written back, so this is benign by design -- do not "fix" it.
    """
    t = t_ref[...]                                   # (tm, 4C) bf16
    t32 = t.astype(jnp.float32)
    inv_c4 = 1.0 / t32.shape[-1]

    # One-pass f32 statistics (biased variance, matching torch.nn.LayerNorm).
    mean = jnp.sum(t32, axis=-1, keepdims=True) * inv_c4
    ex2 = jnp.sum(t32 * t32, axis=-1, keepdims=True) * inv_c4
    var = jnp.maximum(ex2 - mean * mean, 0.0)
    rstd = lax.rsqrt(var + eps)

    # Raw bf16 MXU matmul with f32 accumulation; normalization applied as a
    # per-token affine correction on the (tm, 2C) result.
    acc = jnp.dot(t, w_ref[...], preferred_element_type=jnp.float32)   # (tm, 2C)
    gb = gb_ref[...]                                                   # (2, 2C)
    out = rstd * acc - (rstd * mean) * gb[0:1, :] + gb[1:2, :]
    o_ref[...] = out.astype(o_ref.dtype)


def _vmem_budget():
    """Generation-aware scoped-VMEM limit and token-block budget (bytes)."""
    try:
        cap = int(pltpu.get_tpu_info().vmem_capacity_bytes)
    except Exception:  # non-TPU backend / older jax -> conservative default
        cap = 64 << 20
    # 32 MiB scoped limit on v7x (64 MiB physical VMEM), 64 MiB on v5e/v6e (128 MiB).
    limit = min(cap // 2, 64 << 20)
    budget = (limit * 3) // 4          # blocks + in-kernel f32 temporaries headroom
    return limit, budget


def _pick_token_tile(m, bytes_per_token, budget_bytes, *, max_tokens=4096):
    """Largest token tile within the VMEM budget; >= 2 grid steps when possible."""
    t = max(16, min(max_tokens, budget_bytes // max(bytes_per_token, 1)))
    if m >= 16:
        # At least two grid steps: lets the "parallel" axis shard across both v7x
        # TensorCores and overlaps DMA with compute on every generation.
        t = min(t, -(-m // 2))
    if t >= m:
        return m                        # single full-extent block (any size allowed)
    t = max(16, (t // 16) * 16)         # bf16 sublane-tile aligned (also fine for f32)
    # Prefer a nearby tile that divides M (avoids a masked boundary block); a
    # non-dividing tile is still correct (rows are independent, OOB writes masked).
    for cand in range(t, max(16, t - 256) - 1, -16):
        if m % cand == 0:
            return cand
    return t


def patch_merging(x, gamma, beta, w_reduction, *, eps=1e-5, matmul_dtype=jnp.bfloat16):
    """
    x:           (B, C, H, W)
    gamma, beta: (4C,)      LayerNorm affine parameters
    w_reduction: (2C, 4C)   nn.Linear(4C, 2C, bias=False).weight (torch layout)
    returns:     (B, (H/2)*(W/2), 2C) in x.dtype
    """
    B, C, H, W = x.shape
    assert H % 2 == 0 and W % 2 == 0, "PatchMerging requires even H and W"
    C2, C4 = 2 * C, 4 * C
    L = (H // 2) * (W // 2)
    M = B * L

    # Single fused XLA layout pass: (B, C, H, W) -> (M, 4C) merged tokens, cast to
    # bf16 in the same pass.  Feature order matches torch: [x0 | x1 | x2 | x3] =
    # [(dh,dw)=(0,0),(1,0),(0,1),(1,1)]  ->  flatten order (dw, dh, c).
    tokens = jnp.transpose(
        x.reshape(B, C, H // 2, 2, W // 2, 2), (0, 2, 4, 5, 3, 1)
    ).reshape(M, C4).astype(matmul_dtype)

    # Fold the LayerNorm affine around the projection (tiny, one-time, wrapper-side).
    ws = jnp.transpose(w_reduction).astype(jnp.float32)        # (4C, 2C): out = y @ ws
    wg = gamma.astype(jnp.float32)[:, None] * ws               # (4C, 2C)
    wg_mx = wg.astype(matmul_dtype)
    # colsum over the bf16-rounded weights so the mean correction matches the MXU operand.
    g_row = jnp.sum(wg_mx.astype(jnp.float32), axis=0, keepdims=True)   # (1, 2C)
    b_row = (beta.astype(jnp.float32) @ ws).reshape(1, C2)              # (1, 2C)
    gb = jnp.concatenate([g_row, b_row], axis=0)                        # (2, 2C) f32

    # Tile sizing: double-buffered in/out blocks + in-kernel f32 temporaries
    # (upcast, squares, acc) per token.
    in_bytes = jnp.dtype(matmul_dtype).itemsize
    bytes_per_token = 2 * (C4 * in_bytes) + 2 * (C2 * 4) + 48 * C
    vmem_limit, budget = _vmem_budget()
    tm = _pick_token_tile(M, bytes_per_token, budget)
    grid = (pl.cdiv(M, tm),)

    out = pl.pallas_call(
        functools.partial(_patch_merging_kernel, eps=eps),
        out_shape=jax.ShapeDtypeStruct((M, C2), x.dtype),
        grid_spec=pltpu.PrefetchScalarGridSpec(
            num_scalar_prefetch=0,
            grid=grid,
            in_specs=[
                pl.BlockSpec((tm, C4), lambda i: (i, 0)),
                pl.BlockSpec((C4, C2), lambda i: (0, 0)),
                pl.BlockSpec((2, C2), lambda i: (0, 0)),
            ],
            out_specs=pl.BlockSpec((tm, C2), lambda i: (i, 0)),
        ),
        compiler_params=pltpu.CompilerParams(
            dimension_semantics=("parallel",),
            vmem_limit_bytes=vmem_limit,
        ),
    )(tokens, wg_mx, gb)

    return out.reshape(B, L, C2)


def _reference(x, gamma, beta, w_reduction, eps=1e-5):
    B, C, H, W = x.shape
    xh = jnp.transpose(x, (0, 2, 3, 1))
    x0 = xh[:, 0::2, 0::2, :]
    x1 = xh[:, 1::2, 0::2, :]
    x2 = xh[:, 0::2, 1::2, :]
    x3 = xh[:, 1::2, 1::2, :]
    t = jnp.concatenate([x0, x1, x2, x3], axis=-1).reshape(B, -1, 4 * C)
    mean = jnp.mean(t, axis=-1, keepdims=True)
    var = jnp.mean((t - mean) ** 2, axis=-1, keepdims=True)
    t = (t - mean) / jnp.sqrt(var + eps) * gamma + beta
    return jnp.einsum("blk,ok->blo", t, w_reduction)


def _run_case(key, B, C, H, W, atol=2e-2, rtol=2e-2):
    k_x, k_w, k_g, k_b = jax.random.split(key, 4)
    x = jax.random.normal(k_x, (B, C, H, W), dtype=jnp.float32)
    w_reduction = jax.random.normal(k_w, (2 * C, 4 * C), dtype=jnp.float32) * 0.1
    gamma = 1.0 + 0.05 * jax.random.normal(k_g, (4 * C,), dtype=jnp.float32)
    beta = 0.05 * jax.random.normal(k_b, (4 * C,), dtype=jnp.float32)

    out = jax.block_until_ready(patch_merging(x, gamma, beta, w_reduction))
    ref = _reference(x, gamma, beta, w_reduction)
    assert out.shape == (B, (H // 2) * (W // 2), 2 * C), out.shape
    max_err = float(jnp.max(jnp.abs(out - ref)))
    assert jnp.allclose(out, ref, atol=atol, rtol=rtol), f"mismatch: max abs err {max_err}"


if __name__ == "__main__":
    key = jax.random.PRNGKey(0)
    k1, k2, k3 = jax.random.split(key, 3)
    _run_case(k1, B=2, C=4, H=16, W=16)   # M=128 -> 2 grid steps, dividing tile
    _run_case(k2, B=2, C=8, H=48, W=48)   # M=1152 -> 2 grid steps, weight block reused
    _run_case(k3, B=1, C=4, H=12, W=20)   # M=60 -> non-dividing tile, masked boundary block
    print("KERNEL_OK")
</pallas_src>

<mosaic_0001>
module attributes {stable_mosaic.version = 11 : i64} {
  func.func @_patch_merging_kernel(%arg0: i32, %arg1: memref<64x16xbf16, #tpu.memory_space<vmem>>, %arg2: memref<16x8xbf16, #tpu.memory_space<vmem>>, %arg3: memref<2x8xf32, #tpu.memory_space<vmem>>, %arg4: memref<64x8xf32, #tpu.memory_space<vmem>>) attributes {dimension_semantics = [#tpu.dimension_semantics<parallel>], iteration_bounds = array<i64: 2>, scalar_prefetch = 0 : i64, scratch_operands = 0 : i64, tpu.core_type = #tpu.core_type<tc>, window_params = [{transform_indices = @transform_0, window_bounds = array<i64: 64, 16>}, {pipeline_mode = #tpu.pipeline_mode<synchronous>, transform_indices = @transform_1, window_bounds = array<i64: 16, 8>}, {pipeline_mode = #tpu.pipeline_mode<synchronous>, transform_indices = @transform_2, window_bounds = array<i64: 2, 8>}, {transform_indices = @transform_3, window_bounds = array<i64: 64, 8>}]} {
    %c0 = arith.constant 0 : index
    %c0_0 = arith.constant 0 : index
    %0 = vector.load %arg1[%c0, %c0_0] : memref<64x16xbf16, #tpu.memory_space<vmem>>, vector<64x16xbf16>
    %1 = arith.extf %0 : vector<64x16xbf16> to vector<64x16xf32>
    %cst = arith.constant dense<0.000000e+00> : vector<64xf32>
    %2 = vector.multi_reduction <add>, %1, %cst [1] : vector<64x16xf32> to vector<64xf32>
    %3 = vector.shape_cast %2 : vector<64xf32> to vector<64x1xf32>
    %cst_1 = arith.constant 6.250000e-02 : f32
    %4 = vector.broadcast %cst_1 : f32 to vector<64x1xf32>
    %5 = arith.mulf %3, %4 : vector<64x1xf32>
    %6 = arith.mulf %1, %1 : vector<64x16xf32>
    %cst_2 = arith.constant dense<0.000000e+00> : vector<64xf32>
    %7 = vector.multi_reduction <add>, %6, %cst_2 [1] : vector<64x16xf32> to vector<64xf32>
    %8 = vector.shape_cast %7 : vector<64xf32> to vector<64x1xf32>
    %cst_3 = arith.constant 6.250000e-02 : f32
    %9 = vector.broadcast %cst_3 : f32 to vector<64x1xf32>
    %10 = arith.mulf %8, %9 : vector<64x1xf32>
    %11 = arith.mulf %5, %5 : vector<64x1xf32>
    %12 = arith.subf %10, %11 : vector<64x1xf32>
    %cst_4 = arith.constant 0.000000e+00 : f32
    %13 = vector.broadcast %cst_4 : f32 to vector<64x1xf32>
    %14 = arith.maximumf %12, %13 : vector<64x1xf32>
    %cst_5 = arith.constant 9.99999974E-6 : f32
    %15 = vector.broadcast %cst_5 : f32 to vector<64x1xf32>
    %16 = arith.addf %14, %15 : vector<64x1xf32>
    %17 = math.rsqrt %16 : vector<64x1xf32>
    %c0_6 = arith.constant 0 : index
    %c0_7 = arith.constant 0 : index
    %18 = vector.load %arg2[%c0_6, %c0_7] : memref<16x8xbf16, #tpu.memory_space<vmem>>, vector<16x8xbf16>
    %cst_8 = arith.constant dense<0.000000e+00> : vector<64x8xf32>
    %19 = tpu.matmul %0, %18, %cst_8 {dimension_numbers = #tpu.dot_dimension_numbers<[1], [0], [0], [1], [0, 0, 1, 1], [], []>} : vector<64x16xbf16>, vector<16x8xbf16>, vector<64x8xf32> -> vector<64x8xf32>
    %c0_9 = arith.constant 0 : index
    %c0_10 = arith.constant 0 : index
    %20 = vector.load %arg3[%c0_9, %c0_10] : memref<2x8xf32, #tpu.memory_space<vmem>>, vector<2x8xf32>
    %21 = vector.broadcast %17 : vector<64x1xf32> to vector<64x8xf32>
    %22 = arith.mulf %21, %19 : vector<64x8xf32>
    %23 = arith.mulf %17, %5 : vector<64x1xf32>
    %24 = vector.extract_strided_slice %20 {offsets = [0, 0], sizes = [1, 8], strides = [1, 1]} : vector<2x8xf32> to vector<1x8xf32>
    %25 = vector.broadcast %23 : vector<64x1xf32> to vector<64x8xf32>
    %26 = vector.broadcast %24 : vector<1x8xf32> to vector<64x8xf32>
    %27 = arith.mulf %25, %26 : vector<64x8xf32>
    %28 = arith.subf %22, %27 : vector<64x8xf32>
    %29 = vector.extract_strided_slice %20 {offsets = [1, 0], sizes = [1, 8], strides = [1, 1]} : vector<2x8xf32> to vector<1x8xf32>
    %30 = vector.broadcast %29 : vector<1x8xf32> to vector<64x8xf32>
    %31 = arith.addf %28, %30 : vector<64x8xf32>
    %c0_11 = arith.constant 0 : index
    %c0_12 = arith.constant 0 : index
    %32 = vector.load %arg4[%c0_11, %c0_12] : memref<64x8xf32, #tpu.memory_space<vmem>>, vector<64x8xf32>
    tpu.vector_store %arg4[%c0_11, %c0_12], %31 {strides = array<i32>} : memref<64x8xf32, #tpu.memory_space<vmem>>, vector<64x8xf32>,
    return
  }
  func.func @transform_0(%arg0: i32) -> (i32, i32) {
    %c0_i32 = arith.constant 0 : i32
    %c0_i32_0 = arith.constant 0 : i32
    return %arg0, %c0_i32 : i32, i32
  }
  func.func @transform_1(%arg0: i32) -> (i32, i32) {
    %c0_i32 = arith.constant 0 : i32
    %c0_i32_0 = arith.constant 0 : i32
    %c0_i32_1 = arith.constant 0 : i32
    return %c0_i32, %c0_i32_0 : i32, i32
  }
  func.func @transform_2(%arg0: i32) -> (i32, i32) {
    %c0_i32 = arith.constant 0 : i32
    %c0_i32_0 = arith.constant 0 : i32
    %c0_i32_1 = arith.constant 0 : i32
    return %c0_i32, %c0_i32_0 : i32, i32
  }
  func.func @transform_3(%arg0: i32) -> (i32, i32) {
    %c0_i32 = arith.constant 0 : i32
    %c0_i32_0 = arith.constant 0 : i32
    return %arg0, %c0_i32 : i32, i32
  }
}

</mosaic_0001>

<llo_original>
// kernel: tpu_custom_call.1
$region0: #{tpu_custom_call.1}
  #allocation0 [shape = 'u32[]', space=smem, size = 0x4, offset = 0x4, fixed_abs, tag = 'smem constant byte address 0x4 - core index']
  #allocation1 [shape = 'u32[144,128]{1,0:T(1,128)}', space=vmem, size = 0x12000, scoped, tag = 'internal scratch']
  %s0 = inlined_call_operand.vmem [shape: bf16[128,16], index: 0, kind: input, shape index: {}]
  %s1 = inlined_call_operand.vmem [shape: bf16[16,8], index: 1, kind: input, shape index: {}]
  %s2 = inlined_call_operand.vmem [shape: f32[2,8], index: 2, kind: input, shape index: {}]
  %s3 = inlined_call_operand.vmem [shape: f32[128,8], index: 3, kind: output, shape index: {}]
  %s4 = sld [smem:[#allocation0]]
  $region45: #{tpu_custom_call.1} parent=0
    _
  %s6 = ssub.s32 1, %s4
  %s7 = scalar_select 0, %s6, %s4
  loop: start=0, step=1, limit=4
  $region2: #{tpu_custom_call.1} parent=0 // loop_pre_header
    _
  $region3: #{tpu_custom_call.1} parent=0 // loop_header
    %s9 = sphi 0, %s13
    %p10 = scmp.ge.s32.totalorder %s9, 4
    %s19 = sphi 0, %s21
    %s22 = sphi 0, %s19
    %s23 = sphi 0, %s22
    %s39 = sphi 0, %s23
    %s43 = sphi 0, %s43
    %s45 = sphi 0, %s43
    %s46 = sphi 0, %s45
    %s60 = sphi 0, %s46
    %s64 = sphi 0, %s64
    %s66 = sphi 0, %s64
    %s67 = sphi 0, %s66
    %s81 = sphi 0, %s67
    %s87 = sphi 0, %s89
    %s90 = sphi 0, %s87
    %s91 = sphi 0, %s90
    %s107 = sphi 0, %s91
  $region4: #{tpu_custom_call.1} parent=0 // loop_header_branch
    %12 = sbr.rel (%p10) target = $region8
  $region5: #{tpu_custom_call.1} parent=0 // loop_body
    %s14 = ssub.s32 %s9, 1
    %s15 = ssub.s32 %s9, 2
    %s16 = sadd.s32 %s9, 1
    %s17 = ssub.s32 %s9, %s16
    %p18 = scmp.eq.s32.totalorder %s17, 0
    %s20 = sadd.s32 %s19, 1
    %s21 = scalar_select %p18, %s19, %s20
    %p24 = pneg %p18
    %p25 = scmp.eq.s32.totalorder %s9, 1
    %p26 = por %p24, %p25
    %p27 = scmp.ne.s32.totalorder %s19, %s22
    %p28 = scmp.eq.s32.totalorder %s9, 0
    %p29 = por %p27, %p28
    %p30 = scmp.ne.s32.totalorder %s19, %s22
    %p31 = scmp.eq.s32.totalorder %s14, 1
    %p32 = por %p30, %p31
    %p33 = scmp.ne.s32.totalorder %s22, %s23
    %p34 = scmp.eq.s32.totalorder %s14, 0
    %p35 = por %p33, %p34
    %p36 = scmp.ne.s32.totalorder %s22, %s23
    %p37 = scmp.eq.s32.totalorder %s15, 1
    %p38 = por %p36, %p37
    %p40 = scmp.ne.s32.totalorder %s23, %s39
    %p41 = scmp.eq.s32.totalorder %s15, 0
    %p42 = por %p40, %p41
    %s44 = sadd.s32 %s43, 1
    %p47 = scmp.eq.s32.totalorder %s9, 1
    %p48 = scmp.ne.s32.totalorder %s43, %s45
    %p49 = scmp.eq.s32.totalorder %s9, 0
    %p50 = por %p48, %p49
    %p51 = scmp.ne.s32.totalorder %s43, %s45
    %p52 = scmp.eq.s32.totalorder %s14, 1
    %p53 = por %p51, %p52
    %p54 = scmp.ne.s32.totalorder %s45, %s46
    %p55 = scmp.eq.s32.totalorder %s14, 0
    %p56 = por %p54, %p55
    %p57 = scmp.ne.s32.totalorder %s45, %s46
    %p58 = scmp.eq.s32.totalorder %s15, 1
    %p59 = por %p57, %p58
    %p61 = scmp.ne.s32.totalorder %s46, %s60
    %p62 = scmp.eq.s32.totalorder %s15, 0
    %p63 = por %p61, %p62
    %s65 = sadd.s32 %s64, 1
    %p68 = scmp.eq.s32.totalorder %s9, 1
    %p69 = scmp.ne.s32.totalorder %s64, %s66
    %p70 = scmp.eq.s32.totalorder %s9, 0
    %p71 = por %p69, %p70
    %p72 = scmp.ne.s32.totalorder %s64, %s66
    %p73 = scmp.eq.s32.totalorder %s14, 1
    %p74 = por %p72, %p73
    %p75 = scmp.ne.s32.totalorder %s66, %s67
    %p76 = scmp.eq.s32.totalorder %s14, 0
    %p77 = por %p75, %p76
    %p78 = scmp.ne.s32.totalorder %s66, %s67
    %p79 = scmp.eq.s32.totalorder %s15, 1
    %p80 = por %p78, %p79
    %p82 = scmp.ne.s32.totalorder %s67, %s81
    %p83 = scmp.eq.s32.totalorder %s15, 0
    %p84 = por %p82, %p83
    %s85 = ssub.s32 %s9, %s16
    %p86 = scmp.eq.s32.totalorder %s85, 0
    %s88 = sadd.s32 %s87, 1
    %s89 = scalar_select %p86, %s87, %s88
    %p92 = pneg %p86
    %p93 = scmp.eq.s32.totalorder %s9, 1
    %p94 = por %p92, %p93
    %p95 = scmp.ne.s32.totalorder %s87, %s90
    %p96 = scmp.eq.s32.totalorder %s9, 0
    %p97 = por %p95, %p96
    %p98 = scmp.ne.s32.totalorder %s87, %s90
    %p99 = scmp.eq.s32.totalorder %s14, 1
    %p100 = por %p98, %p99
    %p101 = scmp.ne.s32.totalorder %s90, %s91
    %p102 = scmp.eq.s32.totalorder %s14, 0
    %p103 = por %p101, %p102
    %p104 = scmp.ne.s32.totalorder %s90, %s91
    %p105 = scmp.eq.s32.totalorder %s15, 1
    %p106 = por %p104, %p105
    %p108 = scmp.ne.s32.totalorder %s91, %s107
    %p109 = scmp.eq.s32.totalorder %s15, 0
    %p110 = por %p108, %p109
    %p111 = scmp.le.s32.totalorder 1, %s9
    %p112 = scmp.lt.s32.totalorder %s9, 3
    %p113 = pnand %p111, %p112
    %p114 = pneg %p113
    // Predicated region
    $region9: #{tpu_custom_call.1} parent=5 // pred_check
      _
    $region10: #{tpu_custom_call.1} parent=5 // pred_check_branch
      %116 = sbr.rel (%p113) target = $region12
    $region11: #{tpu_custom_call.1} parent=5 // pred_region
      %s117 = ssub.s32 %s9, 1
      // Predicated region
      $region13: #{tpu_custom_call.1} parent=11 // pred_check
        %p118 = pneg %p56
      $region14: #{tpu_custom_call.1} parent=11 // pred_check_branch
        %120 = sbr.rel (%p118) target = $region16
      $region15: #{tpu_custom_call.1} parent=11 // pred_region
        _
      $region16: #{tpu_custom_call.1} parent=11 // pred_fallthru
        _
      // Predicated region
      $region17: #{tpu_custom_call.1} parent=11 // pred_check
        %p121 = pneg %p77
      $region18: #{tpu_custom_call.1} parent=11 // pred_check_branch
        %123 = sbr.rel (%p121) target = $region20
      $region19: #{tpu_custom_call.1} parent=11 // pred_region
        _
      $region20: #{tpu_custom_call.1} parent=11 // pred_fallthru
        _
    $region12: #{tpu_custom_call.1} parent=5 // pred_fallthru
      _
    %p124 = scmp.lt.s32.totalorder %s9, 2
    // Predicated region
    $region21: #{tpu_custom_call.1} parent=5 // pred_check
      %p125 = pneg %p124
    $region22: #{tpu_custom_call.1} parent=5 // pred_check_branch
      %127 = sbr.rel (%p125) target = $region24
    $region23: #{tpu_custom_call.1} parent=5 // pred_region
      // Predicated region
      $region25: #{tpu_custom_call.1} parent=23 // pred_check
        %p128 = pneg %p29
      $region26: #{tpu_custom_call.1} parent=23 // pred_check_branch
        %130 = sbr.rel (%p128) target = $region28
      $region27: #{tpu_custom_call.1} parent=23 // pred_region
        %s131 = smul.u32 8, %s9
        %p132 = scmp.lt.s32.totalorder %s131, 15
        %s133 = scalar_select %p132, %s131, 15
        %s134 = smul.addr %s133, 4
        %s135 = scalar_lea.vmem %s0, %s134
        %s136 = smul.u32 8, %s9
      $region28: #{tpu_custom_call.1} parent=23 // pred_fallthru
        _
    $region24: #{tpu_custom_call.1} parent=5 // pred_fallthru
      _
    %p137 = scmp.le.s32.totalorder 1, %s9
    %p138 = scmp.lt.s32.totalorder %s9, 3
    %p139 = pnand %p137, %p138
    %p140 = pneg %p139
    // Predicated region
    $region29: #{tpu_custom_call.1} parent=5 // pred_check
      _
    $region30: #{tpu_custom_call.1} parent=5 // pred_check_branch
      %142 = sbr.rel (%p139) target = $region32
    $region31: #{tpu_custom_call.1} parent=5 // pred_region
      %s143 = ssub.s32 %s9, 1
      %s144 = smul.u32 8, %s14
      %p145 = scmp.lt.s32.totalorder %s144, 15
      %s146 = scalar_select %p145, %s144, 15
      %s147 = smul.addr %s146, 4
      %s148 = scalar_lea.vmem %s0, %s147
      %p149 = pneg %p35
      %p150 = pneg %p32
      %p151 = pneg %p56
      %p152 = pneg %p53
      %p153 = pneg %p77
      %p154 = pneg %p74
      %p155 = pneg %p103
      %p156 = pneg %p100
      %s157 = smul.u32 8, %s14
      %p158 = scmp.lt.s32.totalorder %s157, 15
      %s159 = scalar_select %p158, %s157, 15
      %s160 = smul.addr %s159, 8
      %s161 = scalar_lea.vmem %s3, %s160
      %s162 = smul.u32 8, %s14
      %p163 = scmp.lt.s32.totalorder %s162, 15
      %s164 = scalar_select %p163, %s162, 15
      %s165 = smul.addr %s164, 4
      %s166 = scalar_lea.vmem %s0, %s165
      %s167 = smul.u32 8, %s14
      %s168 = smul.u32 8, %s14
      %p169 = scmp.lt.s32.totalorder %s168, 15
      %s170 = scalar_select %p169, %s168, 15
      %s171 = smul.addr %s170, 8
      %s172 = scalar_lea.vmem %s3, %s171
      %s173 = smul.u32 8, %s14
      %v175 = vld [vmem:[%s166] sm:$0xf]
      %v176 = vld [vmem:[%s166 + $0x4] sm:$0xf]
      %v177 = vld [vmem:[%s166 + $0x8] sm:$0xf]
      %v178 = vld [vmem:[%s166 + $0xc] sm:$0xf]
      %v179 = vld [vmem:[%s166 + $0x10] sm:$0xf]
      %v180 = vld [vmem:[%s166 + $0x14] sm:$0xf]
      %v181 = vld [vmem:[%s166 + $0x18] sm:$0xf]
      %v182 = vld [vmem:[%s166 + $0x1c] sm:$0xf]
      %v183 = vunpack.c.l.bf16 %v175
      %v184 = vunpack.c.l.bf16 %v176
      %v185 = vunpack.c.l.bf16 %v177
      %v186 = vunpack.c.l.bf16 %v178
      %v187 = vunpack.c.l.bf16 %v179
      %v188 = vunpack.c.l.bf16 %v180
      %v189 = vunpack.c.l.bf16 %v181
      %v190 = vunpack.c.l.bf16 %v182
      %vm191 = vcmask 130048
      %v192 = vsel %vm191, %v183, 0.0
      %193 = vadd.xlane.f32.xlu0 %v192
      %v194 = vpop.xlane.xlu0 %193
      %v195 = vsel %vm191, %v184, 0.0
      %196 = vadd.xlane.f32.xlu0 %v195
      %v197 = vpop.xlane.xlu0 %196
      %v198 = vsel %vm191, %v185, 0.0
      %199 = vadd.xlane.f32.xlu0 %v198
      %v200 = vpop.xlane.xlu0 %199
      %v201 = vsel %vm191, %v186, 0.0
      %202 = vadd.xlane.f32.xlu0 %v201
      %v203 = vpop.xlane.xlu0 %202
      %v204 = vsel %vm191, %v187, 0.0
      %205 = vadd.xlane.f32.xlu0 %v204
      %v206 = vpop.xlane.xlu0 %205
      %v207 = vsel %vm191, %v188, 0.0
      %208 = vadd.xlane.f32.xlu0 %v207
      %v209 = vpop.xlane.xlu0 %208
      %v210 = vsel %vm191, %v189, 0.0
      %211 = vadd.xlane.f32.xlu0 %v210
      %v212 = vpop.xlane.xlu0 %211
      %v213 = vsel %vm191, %v190, 0.0
      %214 = vadd.xlane.f32.xlu0 %v213
      %v215 = vpop.xlane.xlu0 %214
      %v216 = vmul.f32 %v194, 0.0625
      %v217 = vmul.f32 %v197, 0.0625
      %v218 = vmul.f32 %v200, 0.0625
      %v219 = vmul.f32 %v203, 0.0625
      %v220 = vmul.f32 %v206, 0.0625
      %v221 = vmul.f32 %v209, 0.0625
      %v222 = vmul.f32 %v212, 0.0625
      %v223 = vmul.f32 %v215, 0.0625
      %v224 = vmul.f32 %v183, %v183
      %v225 = vmul.f32 %v184, %v184
      %v226 = vmul.f32 %v185, %v185
      %v227 = vmul.f32 %v186, %v186
      %v228 = vmul.f32 %v187, %v187
      %v229 = vmul.f32 %v188, %v188
      %v230 = vmul.f32 %v189, %v189
      %v231 = vmul.f32 %v190, %v190
      %v232 = vsel %vm191, %v224, 0.0
      %233 = vadd.xlane.f32.xlu0 %v232
      %v234 = vpop.xlane.xlu0 %233
      %v235 = vsel %vm191, %v225, 0.0
      %236 = vadd.xlane.f32.xlu0 %v235
      %v237 = vpop.xlane.xlu0 %236
      %v238 = vsel %vm191, %v226, 0.0
      %239 = vadd.xlane.f32.xlu0 %v238
      %v240 = vpop.xlane.xlu0 %239
      %v241 = vsel %vm191, %v227, 0.0
      %242 = vadd.xlane.f32.xlu0 %v241
      %v243 = vpop.xlane.xlu0 %242
      %v244 = vsel %vm191, %v228, 0.0
      %245 = vadd.xlane.f32.xlu0 %v244
      %v246 = vpop.xlane.xlu0 %245
      %v247 = vsel %vm191, %v229, 0.0
      %248 = vadd.xlane.f32.xlu0 %v247
      %v249 = vpop.xlane.xlu0 %248
      %v250 = vsel %vm191, %v230, 0.0
      %251 = vadd.xlane.f32.xlu0 %v250
      %v252 = vpop.xlane.xlu0 %251
      %v253 = vsel %vm191, %v231, 0.0
      %254 = vadd.xlane.f32.xlu0 %v253
      %v255 = vpop.xlane.xlu0 %254
      %v256 = vmul.f32 %v234, 0.0625
      %v257 = vmul.f32 %v237, 0.0625
      %v258 = vmul.f32 %v240, 0.0625
      %v259 = vmul.f32 %v243, 0.0625
      %v260 = vmul.f32 %v246, 0.0625
      %v261 = vmul.f32 %v249, 0.0625
      %v262 = vmul.f32 %v252, 0.0625
      %v263 = vmul.f32 %v255, 0.0625
      %v264 = vmul.f32 %v216, %v216
      %v265 = vmul.f32 %v217, %v217
      %v266 = vmul.f32 %v218, %v218
      %v267 = vmul.f32 %v219, %v219
      %v268 = vmul.f32 %v220, %v220
      %v269 = vmul.f32 %v221, %v221
      %v270 = vmul.f32 %v222, %v222
      %v271 = vmul.f32 %v223, %v223
      %v272 = vsub.f32 %v256, %v264
      %v273 = vsub.f32 %v257, %v265
      %v274 = vsub.f32 %v258, %v266
      %v275 = vsub.f32 %v259, %v267
      %v276 = vsub.f32 %v260, %v268
      %v277 = vsub.f32 %v261, %v269
      %v278 = vsub.f32 %v262, %v270
      %v279 = vsub.f32 %v263, %v271
      %v280 = vmax.f32 %v272, 0.0
      %v281 = vmax.f32 %v273, 0.0
      %v282 = vmax.f32 %v274, 0.0
      %v283 = vmax.f32 %v275, 0.0
      %v284 = vmax.f32 %v276, 0.0
      %v285 = vmax.f32 %v277, 0.0
      %v286 = vmax.f32 %v278, 0.0
      %v287 = vmax.f32 %v279, 0.0
      %v288 = vadd.f32 %v280, 1e-05
      %v289 = vadd.f32 %v281, 1e-05
      %v290 = vadd.f32 %v282, 1e-05
      %v291 = vadd.f32 %v283, 1e-05
      %v292 = vadd.f32 %v284, 1e-05
      %v293 = vadd.f32 %v285, 1e-05
      %v294 = vadd.f32 %v286, 1e-05
      %v295 = vadd.f32 %v287, 1e-05
      %v296 = vrsqrt.pop %v288
      %v297 = vrsqrt.pop %v289
      %v298 = vrsqrt.pop %v290
      %v299 = vrsqrt.pop %v291
      %v300 = vrsqrt.pop %v292
      %v301 = vrsqrt.pop %v293
      %v302 = vrsqrt.pop %v294
      %v303 = vrsqrt.pop %v295
      %v304 = vld [vmem:[%s1] sm:$0xf]
      %v305 = vld [vmem:[%s1 + $0x4] sm:$0xf]
      %v314 = vunpack.c.l.b16 %v175
      %v315 = vunpack.c.l.b16 %v176
      %v316 = vunpack.c.l.b16 %v177
      %v317 = vunpack.c.l.b16 %v178
      %v318 = vunpack.c.l.b16 %v179
      %v319 = vunpack.c.l.b16 %v180
      %v320 = vunpack.c.l.b16 %v181
      %v321 = vunpack.c.l.b16 %v182
      %v322 = vpack.c.b16 %v315, %v314
      %v323 = vpack.c.b16 %v317, %v316
      %v324 = vpack.c.b16 %v319, %v318
      %v325 = vpack.c.b16 %v321, %v320
      %v328 = vunpack.c.l.b16 %v304
      %v329 = vunpack.c.l.b16 %v305
      %v330 = vpack.c.b16 %v329, %v328
      %v333 = vsel %vm191, %v322, 0
      %v336 = vsel %vm191, %v323, 0
      %v339 = vsel %vm191, %v324, 0
      %v342 = vsel %vm191, %v325, 0
      %344 = vmatprep.subr.bf16.mxu0 0
      %345 = vmatpush1.bf16.msra.mxu0 %v330
      %346 = vmatprep.subr.bf16.mxu0 0
      %347 = vmatpush1.bf16.msra.mxu0 0
      %348 = vmatprep.subr.bf16.mxu0 0
      %349 = vmatpush1.bf16.msra.mxu0 0
      %350 = vmatprep.subr.bf16.mxu0 0
      %351 = vmatpush1.bf16.msra.mxu0 0
      %352 = vmatprep.subr.bf16.mxu0 0
      %353 = vmatpush1.bf16.msra.mxu0 0
      %354 = vmatprep.subr.bf16.mxu0 0
      %355 = vmatpush1.bf16.msra.mxu0 0
      %356 = vmatprep.subr.bf16.mxu0 0
      %357 = vmatpush1.bf16.msra.mxu0 0
      %358 = vmatprep.subr.bf16.mxu0 0
      %359 = vmatpush1.bf16.msra.mxu0 0
      %360 = vmatprep.subr.bf16.mxu0 0
      %361 = vmatpush1.bf16.msra.mxu0 0
      %362 = vmatprep.subr.bf16.mxu0 0
      %363 = vmatpush1.bf16.msra.mxu0 0
      %364 = vmatprep.subr.bf16.mxu0 0
      %365 = vmatpush1.bf16.msra.mxu0 0
      %366 = vmatprep.subr.bf16.mxu0 0
      %367 = vmatpush1.bf16.msra.mxu0 0
      %368 = vmatprep.subr.bf16.mxu0 0
      %369 = vmatpush1.bf16.msra.mxu0 0
      %370 = vmatprep.subr.bf16.mxu0 0
      %371 = vmatpush1.bf16.msra.mxu0 0
      %372 = vmatprep.subr.bf16.mxu0 0
      %373 = vmatpush1.bf16.msra.mxu0 0
      %374 = vmatprep.subr.bf16.mxu0 0
      %375 = vmatpush1.bf16.msra.mxu0 0
      %376 = vmatprep.mubr.bf16.mxu0 0
      %377 = vmatmul.mubr.bf16.gmra.mrb[0].mxu0 %v333
      %v378 = vpop.f32.mrb[0].mxu0
      %v379 = vadd.f32 0.0, %v378
      %v380 = vpop.f32.mrb[0].mxu0
      %v381 = vpop.f32.mrb[0].mxu0
      %v382 = vadd.f32 0.0, %v381
      %v383 = vpop.f32.mrb[0].mxu0
      %384 = vmatprep.mubr.bf16.mxu0 0
      %385 = vmatmul.mubr.bf16.gmra.mrb[0].mxu0 %v336
      %v386 = vpop.f32.mrb[0].mxu0
      %v387 = vadd.f32 0.0, %v386
      %v388 = vpop.f32.mrb[0].mxu0
      %v389 = vpop.f32.mrb[0].mxu0
      %v390 = vadd.f32 0.0, %v389
      %v391 = vpop.f32.mrb[0].mxu0
      %392 = vmatprep.mubr.bf16.mxu0 0
      %393 = vmatmul.mubr.bf16.gmra.mrb[0].mxu0 %v339
      %v394 = vpop.f32.mrb[0].mxu0
      %v395 = vadd.f32 0.0, %v394
      %v396 = vpop.f32.mrb[0].mxu0
      %v397 = vpop.f32.mrb[0].mxu0
      %v398 = vadd.f32 0.0, %v397
      %v399 = vpop.f32.mrb[0].mxu0
      %400 = vmatprep.mubr.bf16.mxu0 0
      %401 = vmatmul.mubr.bf16.gmra.mrb[0].mxu0 %v342
      %v402 = vpop.f32.mrb[0].mxu0
      %v403 = vadd.f32 0.0, %v402
      %v404 = vpop.f32.mrb[0].mxu0
      %v405 = vpop.f32.mrb[0].mxu0
      %v406 = vadd.f32 0.0, %v405
      %v407 = vpop.f32.mrb[0].mxu0
      %408 = vdwg.mxu0
      %v409 = vld [vmem:[%s2] sm:$0x3]
      %v410 = vmul.f32 %v296, %v379
      %v411 = vmul.f32 %v297, %v382
      %v412 = vmul.f32 %v298, %v387
      %v413 = vmul.f32 %v299, %v390
      %v414 = vmul.f32 %v300, %v395
      %v415 = vmul.f32 %v301, %v398
      %v416 = vmul.f32 %v302, %v403
      %v417 = vmul.f32 %v303, %v406
      %v418 = vmul.f32 %v296, %v216
      %v419 = vmul.f32 %v297, %v217
      %v420 = vmul.f32 %v298, %v218
      %v421 = vmul.f32 %v299, %v219
      %v422 = vmul.f32 %v300, %v220
      %v423 = vmul.f32 %v301, %v221
      %v424 = vmul.f32 %v302, %v222
      %v425 = vmul.f32 %v303, %v223
      %v426 = vlaneseq
      %v427 = vshrl.u32 %v426, 7
      %v428 = vsub.s32 0, %v427
      %v429 = vrot.slane %v409, %v428
      %v430 = vmul.f32 %v418, %v429
      %v431 = vmul.f32 %v419, %v429
      %v432 = vmul.f32 %v420, %v429
      %v433 = vmul.f32 %v421, %v429
      %v434 = vmul.f32 %v422, %v429
      %v435 = vmul.f32 %v423, %v429
      %v436 = vmul.f32 %v424, %v429
      %v437 = vmul.f32 %v425, %v429
      %v438 = vsub.f32 %v410, %v430
      %v439 = vsub.f32 %v411, %v431
      %v440 = vsub.f32 %v412, %v432
      %v441 = vsub.f32 %v413, %v433
      %v442 = vsub.f32 %v414, %v434
      %v443 = vsub.f32 %v415, %v435
      %v444 = vsub.f32 %v416, %v436
      %v445 = vsub.f32 %v417, %v437
      %v446 = vlaneseq
      %v447 = vshrl.u32 %v446, 7
      %v448 = vsub.s32 1, %v447
      %v449 = vrot.slane %v409, %v448
      %v450 = vadd.f32 %v438, %v449
      %v451 = vadd.f32 %v439, %v449
      %v452 = vadd.f32 %v440, %v449
      %v453 = vadd.f32 %v441, %v449
      %v454 = vadd.f32 %v442, %v449
      %v455 = vadd.f32 %v443, %v449
      %v456 = vadd.f32 %v444, %v449
      %v457 = vadd.f32 %v445, %v449
      %vm458 = vcmask 64512
      %459 = vst.msk [vmem:[%s172] sm:$0xff] %vm458, %v450
      %460 = vst.msk [vmem:[%s172 + $0x8] sm:$0xff] %vm458, %v451
      %461 = vst.msk [vmem:[%s172 + $0x10] sm:$0xff] %vm458, %v452
      %462 = vst.msk [vmem:[%s172 + $0x18] sm:$0xff] %vm458, %v453
      %463 = vst.msk [vmem:[%s172 + $0x20] sm:$0xff] %vm458, %v454
      %464 = vst.msk [vmem:[%s172 + $0x28] sm:$0xff] %vm458, %v455
      %465 = vst.msk [vmem:[%s172 + $0x30] sm:$0xff] %vm458, %v456
      %466 = vst.msk [vmem:[%s172 + $0x38] sm:$0xff] %vm458, %v457
      %s467 = smul.u32 8, %s14
      %p468 = scmp.lt.s32.totalorder %s467, 15
      %s469 = scalar_select %p468, %s467, 15
      %s470 = smul.addr %s469, 8
      %s471 = scalar_lea.vmem %s3, %s470
      // Predicated region
      $region33: #{tpu_custom_call.1} parent=31 // pred_check
        %p472 = pneg %p100
      $region34: #{tpu_custom_call.1} parent=31 // pred_check_branch
        %474 = sbr.rel (%p472) target = $region36
      $region35: #{tpu_custom_call.1} parent=31 // pred_region
        %s475 = smul.u32 8, %s14
      $region36: #{tpu_custom_call.1} parent=31 // pred_fallthru
        _
    $region32: #{tpu_custom_call.1} parent=5 // pred_fallthru
      _
    %p476 = scmp.le.s32.totalorder 2, %s9
    // Predicated region
    $region37: #{tpu_custom_call.1} parent=5 // pred_check
      %p477 = pneg %p476
    $region38: #{tpu_custom_call.1} parent=5 // pred_check_branch
      %479 = sbr.rel (%p477) target = $region40
    $region39: #{tpu_custom_call.1} parent=5 // pred_region
      %s480 = ssub.s32 %s9, 2
      // Predicated region
      $region41: #{tpu_custom_call.1} parent=39 // pred_check
        %p481 = pneg %p106
      $region42: #{tpu_custom_call.1} parent=39 // pred_check_branch
        %483 = sbr.rel (%p481) target = $region44
      $region43: #{tpu_custom_call.1} parent=39 // pred_region
        %s484 = smul.u32 8, %s15
        %p485 = scmp.lt.s32.totalorder %s484, 15
        %s486 = scalar_select %p485, %s484, 15
        %s487 = smul.addr %s486, 8
        %s488 = scalar_lea.vmem %s3, %s487
      $region44: #{tpu_custom_call.1} parent=39 // pred_fallthru
        _
    $region40: #{tpu_custom_call.1} parent=5 // pred_fallthru
      _
  $region6: #{tpu_custom_call.1} parent=0 // loop_footer
    %s13 = sadd.s32 1, %s9
  $region7: #{tpu_custom_call.1} parent=0 // loop_footer_branch
    %8 = sbr.rel target = $region3
  $region8: #{tpu_custom_call.1} parent=0 // loop_exit
    _

</llo_original>
